<compile_context>
chip_gen: v5e
topology: v5e:2x2
jax: 0.10.0
libtpu: 0.0.40
codegen_flags: <defaults>
</compile_context>

<pallas_src>
import functools

import jax
import jax.numpy as jnp
from jax.experimental import pallas as pl
from jax.experimental.pallas import tpu as pltpu


def _actor_kernel(ss_ref, w1_ref, b1_ref, w2_ref, b2_ref, w3_ref, b3_ref,
                  out_ref, *, max_action, is_discrete, action_dim):
    # Layer 1: relu([state, next_state] @ W1 + b1) — bf16 MXU operands,
    # f32 accumulate; elementwise math stays f32 (v5e has no bf16 VPU/EUP).
    h = jnp.dot(ss_ref[...], w1_ref[...], preferred_element_type=jnp.float32)
    h = jnp.maximum(h + b1_ref[...], 0.0)
    # Layer 2: relu(h @ W2 + b2)
    h = jnp.dot(h.astype(jnp.bfloat16), w2_ref[...],
                preferred_element_type=jnp.float32)
    h = jnp.maximum(h + b2_ref[...], 0.0)
    # Layer 3 head (output lane-padded to a multiple of 128).
    z = jnp.dot(h.astype(jnp.bfloat16), w3_ref[...],
                preferred_element_type=jnp.float32) + b3_ref[...]
    if is_discrete:
        # Mask padded logits so they do not pollute the softmax.
        lane = jax.lax.broadcasted_iota(jnp.int32, z.shape, 1)
        z = jnp.where(lane < action_dim, z, -1e30)
        m = jnp.max(z, axis=-1, keepdims=True)
        e = jnp.exp(z - m)
        denom = jnp.sum(e, axis=-1, keepdims=True)
        # Exact divide (not approx reciprocal) so rows sum to 1 tightly.
        out_ref[...] = (e / denom).astype(out_ref.dtype)
    else:
        out_ref[...] = (max_action * jnp.tanh(z)).astype(out_ref.dtype)


def _round_up(x, m):
    return ((x + m - 1) // m) * m


def _build_actor_call(kernel, *, n_blocks, batch_block, in_feat, hidden,
                      act_pad, cost, weight_mode):
    """Build the pallas_call. `weight_mode` is the pipeline_mode for the
    VMEM-resident weight/bias BlockSpecs (None => default double-buffering)."""
    def resident(shape):
        if weight_mode is None:
            return pl.BlockSpec(shape, lambda i: (0, 0))
        return pl.BlockSpec(shape, lambda i: (0, 0), pipeline_mode=weight_mode)

    batch_spec = lambda feat: pl.BlockSpec((batch_block, feat), lambda i: (i, 0))

    return pl.pallas_call(
        kernel,
        out_shape=jax.ShapeDtypeStruct((n_blocks * batch_block, act_pad),
                                       jnp.bfloat16),
        grid=(n_blocks,),
        in_specs=[
            batch_spec(in_feat),
            resident((in_feat, hidden)), resident((1, hidden)),
            resident((hidden, hidden)), resident((1, hidden)),
            resident((hidden, act_pad)), resident((1, act_pad)),
        ],
        out_specs=batch_spec(act_pad),
        compiler_params=pltpu.CompilerParams(
            dimension_semantics=("parallel",),
            vmem_limit_bytes=32 * 1024 * 1024),
        cost_estimate=cost,
    )


def actor_forward(state, next_state, params, *, max_action, is_discrete):
    """Fused Actor forward. params are f32 (in_features, out_features) + (1, out)."""
    w1, b1, w2, b2, w3, b3 = params
    B, state_dim = state.shape
    in_feat = 2 * state_dim
    hidden = w1.shape[1]
    action_dim = w3.shape[1]

    # Lane-dense head: pad action dim to a multiple of 128 (zeros), slice later.
    act_pad = pl.cdiv(action_dim, 128) * 128
    w3p = jnp.zeros((hidden, act_pad), jnp.float32).at[:, :action_dim].set(w3)
    b3p = jnp.zeros((1, act_pad), jnp.float32).at[:, :action_dim].set(b3)

    # bf16 weights (halves weight DMA; native bf16 MXU). Biases stay f32.
    w1b = w1.astype(jnp.bfloat16)
    w2b = w2.astype(jnp.bfloat16)
    w3b = w3p.astype(jnp.bfloat16)

    # Batch blocking: big blocks (per-step overhead dominates otherwise),
    # >= 2 blocks for large B (v7x megacore), multiples of 16 rows (bf16
    # sublane packing), capped at 2048 rows (fits v7x's 64 MiB VMEM).
    batch_block = min(2048, max(16, _round_up(pl.cdiv(B, 2), 16)))
    n_blocks = pl.cdiv(B, batch_block)
    padded_B = n_blocks * batch_block

    # Merged layer-1 operand: [state, next_state] as one bf16 matrix.
    ss = jnp.concatenate([state, next_state], axis=1).astype(jnp.bfloat16)
    if padded_B != B:
        ss = jnp.pad(ss, ((0, padded_B - B), (0, 0)))

    kernel = functools.partial(
        _actor_kernel,
        max_action=float(max_action),
        is_discrete=bool(is_discrete),
        action_dim=int(action_dim),
    )

    flops = 2 * padded_B * (in_feat * hidden + hidden * hidden + hidden * act_pad)
    weight_bytes = (2 * (in_feat * hidden + hidden * hidden + hidden * act_pad)
                    + 4 * (2 * hidden + act_pad))
    cost = pl.CostEstimate(
        flops=flops,
        transcendentals=padded_B * act_pad,
        bytes_accessed=(2 * padded_B * in_feat          # bf16 input stream
                        + weight_bytes                  # resident weights
                        + 2 * padded_B * act_pad),      # bf16 output stream
    )

    args = (ss, w1b, b1, w2b, b2, w3b, b3p)
    common = dict(n_blocks=n_blocks, batch_block=batch_block, in_feat=in_feat,
                  hidden=hidden, act_pad=act_pad, cost=cost)
    try:
        # Constant-index weights only need a single buffer (saves ~200 KiB VMEM).
        out = _build_actor_call(kernel, weight_mode=pl.Buffered(1), **common)(*args)
    except Exception:
        # Fallback if this Pallas build rejects Buffered(1) on pallas_call specs.
        out = _build_actor_call(kernel, weight_mode=None, **common)(*args)

    return out[:B, :action_dim].astype(jnp.float32)


def init_actor_params(key, state_dim, action_dim, hidden=256):
    """PyTorch-style uniform(-1/sqrt(fan_in), 1/sqrt(fan_in)) init.
    Weights stored (in_features, out_features); biases kept 2D (1, out)."""
    ks = jax.random.split(key, 6)

    def lin(kw, kb, fan_in, fan_out):
        bound = 1.0 / jnp.sqrt(jnp.float32(fan_in))
        w = jax.random.uniform(kw, (fan_in, fan_out), jnp.float32, -bound, bound)
        b = jax.random.uniform(kb, (1, fan_out), jnp.float32, -bound, bound)
        return w, b

    w1, b1 = lin(ks[0], ks[1], 2 * state_dim, hidden)
    w2, b2 = lin(ks[2], ks[3], hidden, hidden)
    w3, b3 = lin(ks[4], ks[5], hidden, action_dim)
    return (w1, b1, w2, b2, w3, b3)


def _reference_f32(state, next_state, params, *, max_action, is_discrete):
    """Pure-JAX f32 reference matching the PyTorch semantics exactly."""
    w1, b1, w2, b2, w3, b3 = params
    ss = jnp.concatenate([state, next_state], axis=1)
    a = jax.nn.relu(ss @ w1 + b1)
    a = jax.nn.relu(a @ w2 + b2)
    z = a @ w3 + b3
    if is_discrete:
        return jax.nn.softmax(z, axis=-1)
    return max_action * jnp.tanh(z)


def _reference_bf16(state, next_state, params, *, max_action, is_discrete):
    """Reference replicating the kernel's bf16-matmul / f32-accumulate scheme
    and the bf16 output store."""
    w1, b1, w2, b2, w3, b3 = params
    bf = jnp.bfloat16
    dot = lambda x, w: jnp.dot(x.astype(bf), w.astype(bf),
                               preferred_element_type=jnp.float32)
    ss = jnp.concatenate([state, next_state], axis=1)
    h = jax.nn.relu(dot(ss, w1) + b1)
    h = jax.nn.relu(dot(h, w2) + b2)
    z = dot(h, w3) + b3
    if is_discrete:
        out = jax.nn.softmax(z, axis=-1)
    else:
        out = max_action * jnp.tanh(z)
    return out.astype(bf).astype(jnp.float32)


if __name__ == "__main__":
    key = jax.random.PRNGKey(0)
    k_params, k_s, k_ns = jax.random.split(key, 3)

    batch = 8
    state_dim = 16
    action_dim = 8
    max_action = 2.0

    params = init_actor_params(k_params, state_dim, action_dim)
    state = jax.random.normal(k_s, (batch, state_dim), jnp.float32)
    next_state = jax.random.normal(k_ns, (batch, state_dim), jnp.float32)

    # Continuous head: max_action * tanh(l3(...))
    out_cont = actor_forward(state, next_state, params,
                             max_action=max_action, is_discrete=False)
    out_cont = jax.block_until_ready(out_cont)
    refm_cont = _reference_bf16(state, next_state, params,
                                max_action=max_action, is_discrete=False)
    ref32_cont = _reference_f32(state, next_state, params,
                                max_action=max_action, is_discrete=False)

    # Discrete head: softmax over actions
    out_disc = actor_forward(state, next_state, params,
                             max_action=max_action, is_discrete=True)
    out_disc = jax.block_until_ready(out_disc)
    refm_disc = _reference_bf16(state, next_state, params,
                                max_action=max_action, is_discrete=True)
    ref32_disc = _reference_f32(state, next_state, params,
                                max_action=max_action, is_discrete=True)

    assert out_cont.shape == (batch, action_dim)
    assert out_disc.shape == (batch, action_dim)
    assert out_cont.dtype == jnp.float32 and out_disc.dtype == jnp.float32
    # Tight check against the bf16-matched reference (same numerics path).
    assert jnp.allclose(out_cont, refm_cont, atol=2e-2, rtol=2e-2)
    assert jnp.allclose(out_disc, refm_disc, atol=2e-2, rtol=2e-2)
    # Loose check against the exact f32 (PyTorch-equivalent) reference.
    assert jnp.allclose(out_cont, ref32_cont, atol=5e-2, rtol=5e-2)
    assert jnp.allclose(out_disc, ref32_disc, atol=5e-2, rtol=5e-2)
    # Softmax rows sum to ~1 (bf16 output rounding bounds the deviation).
    assert jnp.allclose(jnp.sum(out_disc, axis=-1), 1.0, atol=1e-2)

    print("KERNEL_OK")
</pallas_src>

<mosaic_0001>
module attributes {stable_mosaic.version = 11 : i64} {
  func.func @_actor_kernel(%arg0: i32, %arg1: memref<16x32xbf16, #tpu.memory_space<vmem>>, %arg2: memref<32x256xbf16, #tpu.memory_space<vmem>>, %arg3: memref<1x256xf32, #tpu.memory_space<vmem>>, %arg4: memref<256x256xbf16, #tpu.memory_space<vmem>>, %arg5: memref<1x256xf32, #tpu.memory_space<vmem>>, %arg6: memref<256x128xbf16, #tpu.memory_space<vmem>>, %arg7: memref<1x128xf32, #tpu.memory_space<vmem>>, %arg8: memref<16x128xbf16, #tpu.memory_space<vmem>>) attributes {dimension_semantics = [#tpu.dimension_semantics<parallel>], iteration_bounds = array<i64: 1>, scalar_prefetch = 0 : i64, scratch_operands = 0 : i64, tpu.core_type = #tpu.core_type<tc>, window_params = [{transform_indices = @transform_0, window_bounds = array<i64: 16, 32>}, {pipeline_mode = #tpu.pipeline_mode<synchronous>, transform_indices = @transform_1, window_bounds = array<i64: 32, 256>}, {pipeline_mode = #tpu.pipeline_mode<synchronous>, transform_indices = @transform_2, window_bounds = array<i64: 1, 256>}, {pipeline_mode = #tpu.pipeline_mode<synchronous>, transform_indices = @transform_3, window_bounds = array<i64: 256, 256>}, {pipeline_mode = #tpu.pipeline_mode<synchronous>, transform_indices = @transform_4, window_bounds = array<i64: 1, 256>}, {pipeline_mode = #tpu.pipeline_mode<synchronous>, transform_indices = @transform_5, window_bounds = array<i64: 256, 128>}, {pipeline_mode = #tpu.pipeline_mode<synchronous>, transform_indices = @transform_6, window_bounds = array<i64: 1, 128>}, {transform_indices = @transform_7, window_bounds = array<i64: 16, 128>}]} {
    %c0 = arith.constant 0 : index
    %c0_0 = arith.constant 0 : index
    %0 = vector.load %arg1[%c0, %c0_0] : memref<16x32xbf16, #tpu.memory_space<vmem>>, vector<16x32xbf16>
    %c0_1 = arith.constant 0 : index
    %c0_2 = arith.constant 0 : index
    %1 = vector.load %arg2[%c0_1, %c0_2] : memref<32x256xbf16, #tpu.memory_space<vmem>>, vector<32x256xbf16>
    %cst = arith.constant dense<0.000000e+00> : vector<16x256xf32>
    %2 = tpu.matmul %0, %1, %cst {dimension_numbers = #tpu.dot_dimension_numbers<[1], [0], [0], [1], [0, 0, 1, 1], [], []>} : vector<16x32xbf16>, vector<32x256xbf16>, vector<16x256xf32> -> vector<16x256xf32>
    %c0_3 = arith.constant 0 : index
    %c0_4 = arith.constant 0 : index
    %3 = vector.load %arg3[%c0_3, %c0_4] : memref<1x256xf32, #tpu.memory_space<vmem>>, vector<1x256xf32>
    %4 = vector.broadcast %3 : vector<1x256xf32> to vector<16x256xf32>
    %5 = arith.addf %2, %4 : vector<16x256xf32>
    %cst_5 = arith.constant 0.000000e+00 : f32
    %6 = vector.broadcast %cst_5 : f32 to vector<16x256xf32>
    %7 = arith.maximumf %5, %6 : vector<16x256xf32>
    %8 = arith.truncf %7 : vector<16x256xf32> to vector<16x256xbf16>
    %c0_6 = arith.constant 0 : index
    %c0_7 = arith.constant 0 : index
    %9 = vector.load %arg4[%c0_6, %c0_7] : memref<256x256xbf16, #tpu.memory_space<vmem>>, vector<256x256xbf16>
    %cst_8 = arith.constant dense<0.000000e+00> : vector<16x256xf32>
    %10 = tpu.matmul %8, %9, %cst_8 {dimension_numbers = #tpu.dot_dimension_numbers<[1], [0], [0], [1], [0, 0, 1, 1], [], []>} : vector<16x256xbf16>, vector<256x256xbf16>, vector<16x256xf32> -> vector<16x256xf32>
    %c0_9 = arith.constant 0 : index
    %c0_10 = arith.constant 0 : index
    %11 = vector.load %arg5[%c0_9, %c0_10] : memref<1x256xf32, #tpu.memory_space<vmem>>, vector<1x256xf32>
    %12 = vector.broadcast %11 : vector<1x256xf32> to vector<16x256xf32>
    %13 = arith.addf %10, %12 : vector<16x256xf32>
    %cst_11 = arith.constant 0.000000e+00 : f32
    %14 = vector.broadcast %cst_11 : f32 to vector<16x256xf32>
    %15 = arith.maximumf %13, %14 : vector<16x256xf32>
    %16 = arith.truncf %15 : vector<16x256xf32> to vector<16x256xbf16>
    %c0_12 = arith.constant 0 : index
    %c0_13 = arith.constant 0 : index
    %17 = vector.load %arg6[%c0_12, %c0_13] : memref<256x128xbf16, #tpu.memory_space<vmem>>, vector<256x128xbf16>
    %cst_14 = arith.constant dense<0.000000e+00> : vector<16x128xf32>
    %18 = tpu.matmul %16, %17, %cst_14 {dimension_numbers = #tpu.dot_dimension_numbers<[1], [0], [0], [1], [0, 0, 1, 1], [], []>} : vector<16x256xbf16>, vector<256x128xbf16>, vector<16x128xf32> -> vector<16x128xf32>
    %c0_15 = arith.constant 0 : index
    %c0_16 = arith.constant 0 : index
    %19 = vector.load %arg7[%c0_15, %c0_16] : memref<1x128xf32, #tpu.memory_space<vmem>>, vector<1x128xf32>
    %20 = vector.broadcast %19 : vector<1x128xf32> to vector<16x128xf32>
    %21 = arith.addf %18, %20 : vector<16x128xf32>
    %22 = math.tanh %21 : vector<16x128xf32>
    %cst_17 = arith.constant 2.000000e+00 : f32
    %23 = vector.broadcast %cst_17 : f32 to vector<16x128xf32>
    %24 = arith.mulf %23, %22 : vector<16x128xf32>
    %25 = arith.truncf %24 : vector<16x128xf32> to vector<16x128xbf16>
    %c0_18 = arith.constant 0 : index
    %c0_19 = arith.constant 0 : index
    %26 = vector.load %arg8[%c0_18, %c0_19] : memref<16x128xbf16, #tpu.memory_space<vmem>>, vector<16x128xbf16>
    tpu.vector_store %arg8[%c0_18, %c0_19], %25 {strides = array<i32>} : memref<16x128xbf16, #tpu.memory_space<vmem>>, vector<16x128xbf16>,
    return
  }
  func.func @transform_0(%arg0: i32) -> (i32, i32) {
    %c0_i32 = arith.constant 0 : i32
    %c0_i32_0 = arith.constant 0 : i32
    return %arg0, %c0_i32 : i32, i32
  }
  func.func @transform_1(%arg0: i32) -> (i32, i32) {
    %c0_i32 = arith.constant 0 : i32
    %c0_i32_0 = arith.constant 0 : i32
    %c0_i32_1 = arith.constant 0 : i32
    return %c0_i32, %c0_i32_0 : i32, i32
  }
  func.func @transform_2(%arg0: i32) -> (i32, i32) {
    %c0_i32 = arith.constant 0 : i32
    %c0_i32_0 = arith.constant 0 : i32
    %c0_i32_1 = arith.constant 0 : i32
    return %c0_i32, %c0_i32_0 : i32, i32
  }
  func.func @transform_3(%arg0: i32) -> (i32, i32) {
    %c0_i32 = arith.constant 0 : i32
    %c0_i32_0 = arith.constant 0 : i32
    %c0_i32_1 = arith.constant 0 : i32
    return %c0_i32, %c0_i32_0 : i32, i32
  }
  func.func @transform_4(%arg0: i32) -> (i32, i32) {
    %c0_i32 = arith.constant 0 : i32
    %c0_i32_0 = arith.constant 0 : i32
    %c0_i32_1 = arith.constant 0 : i32
    return %c0_i32, %c0_i32_0 : i32, i32
  }
  func.func @transform_5(%arg0: i32) -> (i32, i32) {
    %c0_i32 = arith.constant 0 : i32
    %c0_i32_0 = arith.constant 0 : i32
    %c0_i32_1 = arith.constant 0 : i32
    return %c0_i32, %c0_i32_0 : i32, i32
  }
  func.func @transform_6(%arg0: i32) -> (i32, i32) {
    %c0_i32 = arith.constant 0 : i32
    %c0_i32_0 = arith.constant 0 : i32
    %c0_i32_1 = arith.constant 0 : i32
    return %c0_i32, %c0_i32_0 : i32, i32
  }
  func.func @transform_7(%arg0: i32) -> (i32, i32) {
    %c0_i32 = arith.constant 0 : i32
    %c0_i32_0 = arith.constant 0 : i32
    return %arg0, %c0_i32 : i32, i32
  }
}

module attributes {stable_mosaic.version = 11 : i64} {
  func.func @_actor_kernel(%arg0: i32, %arg1: memref<16x32xbf16, #tpu.memory_space<vmem>>, %arg2: memref<32x256xbf16, #tpu.memory_space<vmem>>, %arg3: memref<1x256xf32, #tpu.memory_space<vmem>>, %arg4: memref<256x256xbf16, #tpu.memory_space<vmem>>, %arg5: memref<1x256xf32, #tpu.memory_space<vmem>>, %arg6: memref<256x128xbf16, #tpu.memory_space<vmem>>, %arg7: memref<1x128xf32, #tpu.memory_space<vmem>>, %arg8: memref<16x128xbf16, #tpu.memory_space<vmem>>) attributes {dimension_semantics = [#tpu.dimension_semantics<parallel>], iteration_bounds = array<i64: 1>, scalar_prefetch = 0 : i64, scratch_operands = 0 : i64, tpu.core_type = #tpu.core_type<tc>, window_params = [{transform_indices = @transform_0, window_bounds = array<i64: 16, 32>}, {pipeline_mode = #tpu.pipeline_mode<synchronous>, transform_indices = @transform_1, window_bounds = array<i64: 32, 256>}, {pipeline_mode = #tpu.pipeline_mode<synchronous>, transform_indices = @transform_2, window_bounds = array<i64: 1, 256>}, {pipeline_mode = #tpu.pipeline_mode<synchronous>, transform_indices = @transform_3, window_bounds = array<i64: 256, 256>}, {pipeline_mode = #tpu.pipeline_mode<synchronous>, transform_indices = @transform_4, window_bounds = array<i64: 1, 256>}, {pipeline_mode = #tpu.pipeline_mode<synchronous>, transform_indices = @transform_5, window_bounds = array<i64: 256, 128>}, {pipeline_mode = #tpu.pipeline_mode<synchronous>, transform_indices = @transform_6, window_bounds = array<i64: 1, 128>}, {transform_indices = @transform_7, window_bounds = array<i64: 16, 128>}]} {
    %c0 = arith.constant 0 : index
    %c0_0 = arith.constant 0 : index
    %0 = vector.load %arg1[%c0, %c0_0] : memref<16x32xbf16, #tpu.memory_space<vmem>>, vector<16x32xbf16>
    %c0_1 = arith.constant 0 : index
    %c0_2 = arith.constant 0 : index
    %1 = vector.load %arg2[%c0_1, %c0_2] : memref<32x256xbf16, #tpu.memory_space<vmem>>, vector<32x256xbf16>
    %cst = arith.constant dense<0.000000e+00> : vector<16x256xf32>
    %2 = tpu.matmul %0, %1, %cst {dimension_numbers = #tpu.dot_dimension_numbers<[1], [0], [0], [1], [0, 0, 1, 1], [], []>} : vector<16x32xbf16>, vector<32x256xbf16>, vector<16x256xf32> -> vector<16x256xf32>
    %c0_3 = arith.constant 0 : index
    %c0_4 = arith.constant 0 : index
    %3 = vector.load %arg3[%c0_3, %c0_4] : memref<1x256xf32, #tpu.memory_space<vmem>>, vector<1x256xf32>
    %4 = vector.broadcast %3 : vector<1x256xf32> to vector<16x256xf32>
    %5 = arith.addf %2, %4 : vector<16x256xf32>
    %cst_5 = arith.constant 0.000000e+00 : f32
    %6 = vector.broadcast %cst_5 : f32 to vector<16x256xf32>
    %7 = arith.maximumf %5, %6 : vector<16x256xf32>
    %8 = arith.truncf %7 : vector<16x256xf32> to vector<16x256xbf16>
    %c0_6 = arith.constant 0 : index
    %c0_7 = arith.constant 0 : index
    %9 = vector.load %arg4[%c0_6, %c0_7] : memref<256x256xbf16, #tpu.memory_space<vmem>>, vector<256x256xbf16>
    %cst_8 = arith.constant dense<0.000000e+00> : vector<16x256xf32>
    %10 = tpu.matmul %8, %9, %cst_8 {dimension_numbers = #tpu.dot_dimension_numbers<[1], [0], [0], [1], [0, 0, 1, 1], [], []>} : vector<16x256xbf16>, vector<256x256xbf16>, vector<16x256xf32> -> vector<16x256xf32>
    %c0_9 = arith.constant 0 : index
    %c0_10 = arith.constant 0 : index
    %11 = vector.load %arg5[%c0_9, %c0_10] : memref<1x256xf32, #tpu.memory_space<vmem>>, vector<1x256xf32>
    %12 = vector.broadcast %11 : vector<1x256xf32> to vector<16x256xf32>
    %13 = arith.addf %10, %12 : vector<16x256xf32>
    %cst_11 = arith.constant 0.000000e+00 : f32
    %14 = vector.broadcast %cst_11 : f32 to vector<16x256xf32>
    %15 = arith.maximumf %13, %14 : vector<16x256xf32>
    %16 = arith.truncf %15 : vector<16x256xf32> to vector<16x256xbf16>
    %c0_12 = arith.constant 0 : index
    %c0_13 = arith.constant 0 : index
    %17 = vector.load %arg6[%c0_12, %c0_13] : memref<256x128xbf16, #tpu.memory_space<vmem>>, vector<256x128xbf16>
    %cst_14 = arith.constant dense<0.000000e+00> : vector<16x128xf32>
    %18 = tpu.matmul %16, %17, %cst_14 {dimension_numbers = #tpu.dot_dimension_numbers<[1], [0], [0], [1], [0, 0, 1, 1], [], []>} : vector<16x256xbf16>, vector<256x128xbf16>, vector<16x128xf32> -> vector<16x128xf32>
    %c0_15 = arith.constant 0 : index
    %c0_16 = arith.constant 0 : index
    %19 = vector.load %arg7[%c0_15, %c0_16] : memref<1x128xf32, #tpu.memory_space<vmem>>, vector<1x128xf32>
    %20 = vector.broadcast %19 : vector<1x128xf32> to vector<16x128xf32>
    %21 = arith.addf %18, %20 : vector<16x128xf32>
    %22 = math.tanh %21 : vector<16x128xf32>
    %cst_17 = arith.constant 2.000000e+00 : f32
    %23 = vector.broadcast %cst_17 : f32 to vector<16x128xf32>
    %24 = arith.mulf %23, %22 : vector<16x128xf32>
    %25 = arith.truncf %24 : vector<16x128xf32> to vector<16x128xbf16>
    %c0_18 = arith.constant 0 : index
    %c0_19 = arith.constant 0 : index
    %26 = vector.load %arg8[%c0_18, %c0_19] : memref<16x128xbf16, #tpu.memory_space<vmem>>, vector<16x128xbf16>
    tpu.vector_store %arg8[%c0_18, %c0_19], %25 {strides = array<i32>} : memref<16x128xbf16, #tpu.memory_space<vmem>>, vector<16x128xbf16>,
    return
  }
  func.func @transform_0(%arg0: i32) -> (i32, i32) {
    %c0_i32 = arith.constant 0 : i32
    %c0_i32_0 = arith.constant 0 : i32
    return %arg0, %c0_i32 : i32, i32
  }
  func.func @transform_1(%arg0: i32) -> (i32, i32) {
    %c0_i32 = arith.constant 0 : i32
    %c0_i32_0 = arith.constant 0 : i32
    %c0_i32_1 = arith.constant 0 : i32
    return %c0_i32, %c0_i32_0 : i32, i32
  }
  func.func @transform_2(%arg0: i32) -> (i32, i32) {
    %c0_i32 = arith.constant 0 : i32
    %c0_i32_0 = arith.constant 0 : i32
    %c0_i32_1 = arith.constant 0 : i32
    return %c0_i32, %c0_i32_0 : i32, i32
  }
  func.func @transform_3(%arg0: i32) -> (i32, i32) {
    %c0_i32 = arith.constant 0 : i32
    %c0_i32_0 = arith.constant 0 : i32
    %c0_i32_1 = arith.constant 0 : i32
    return %c0_i32, %c0_i32_0 : i32, i32
  }
  func.func @transform_4(%arg0: i32) -> (i32, i32) {
    %c0_i32 = arith.constant 0 : i32
    %c0_i32_0 = arith.constant 0 : i32
    %c0_i32_1 = arith.constant 0 : i32
    return %c0_i32, %c0_i32_0 : i32, i32
  }
  func.func @transform_5(%arg0: i32) -> (i32, i32) {
    %c0_i32 = arith.constant 0 : i32
    %c0_i32_0 = arith.constant 0 : i32
    %c0_i32_1 = arith.constant 0 : i32
    return %c0_i32, %c0_i32_0 : i32, i32
  }
  func.func @transform_6(%arg0: i32) -> (i32, i32) {
    %c0_i32 = arith.constant 0 : i32
    %c0_i32_0 = arith.constant 0 : i32
    %c0_i32_1 = arith.constant 0 : i32
    return %c0_i32, %c0_i32_0 : i32, i32
  }
  func.func @transform_7(%arg0: i32) -> (i32, i32) {
    %c0_i32 = arith.constant 0 : i32
    %c0_i32_0 = arith.constant 0 : i32
    return %arg0, %c0_i32 : i32, i32
  }
}

</mosaic_0001>

<llo_original>
// kernel: tpu_custom_call.1
$region0: #{tpu_custom_call.1}
  #allocation0 [shape = 'u32[]', space=smem, size = 0x4, offset = 0x4, fixed_abs, tag = 'smem constant byte address 0x4 - core index']
  #allocation1 [shape = 'u32[72,128]{1,0:T(1,128)}', space=vmem, size = 0x9000, scoped, tag = 'internal scratch']
  %s0 = inlined_call_operand.hbm [shape: bf16[16,32], index: 0, kind: input, shape index: {}]
  %s1 = inlined_call_operand.hbm [shape: bf16[32,256], index: 1, kind: input, shape index: {}]
  %s2 = inlined_call_operand.hbm [shape: f32[1,256], index: 2, kind: input, shape index: {}]
  %s3 = inlined_call_operand.hbm [shape: bf16[256,256], index: 3, kind: input, shape index: {}]
  %s4 = inlined_call_operand.vmem [shape: f32[1,256], index: 4, kind: input, shape index: {}]
  %s5 = inlined_call_operand.hbm [shape: bf16[256,128], index: 5, kind: input, shape index: {}]
  %s6 = inlined_call_operand.vmem [shape: f32[1,128], index: 6, kind: input, shape index: {}]
  %s7 = inlined_call_operand.hbm [shape: bf16[16,128], index: 7, kind: output, shape index: {}]
  %s8 = sld [smem:[#allocation0]]
  $region58: #{tpu_custom_call.1} parent=0
    _
  %s10 = ssub.s32 1, %s8
  %s11 = scalar_select 0, %s10, %s8
  $region1: #{tpu_custom_call.1} parent=0
    #allocation2 [shape = 'u8[4096]{0}', space=vmem, size = 0x1000, scoped, tag = 'input window, operand 0, single buffered']
    #allocation3 [shape = 's32[1]{0}', space=sflag, size = 0x4, scoped, tag = 'scoped memory for tpu_custom_call.1']
    #allocation4 [shape = 's32[1]{0}', space=sflag, size = 0x4, scoped, tag = 'scoped memory for tpu_custom_call.1']
    #allocation5 [shape = 'u8[16384]{0}', space=vmem, size = 0x4000, scoped, tag = 'input window, operand 1, single buffered']
    #allocation6 [shape = 's32[1]{0}', space=sflag, size = 0x4, scoped, tag = 'scoped memory for tpu_custom_call.1']
    #allocation7 [shape = 'u8[1024]{0}', space=vmem, size = 0x400, scoped, tag = 'input window, operand 2, single buffered']
    #allocation8 [shape = 'u8[131072]{0}', space=vmem, size = 0x20000, scoped, tag = 'input window, operand 3, single buffered']
    #allocation9 [shape = 's32[1]{0}', space=sflag, size = 0x4, scoped, tag = 'scoped memory for tpu_custom_call.1']
    #allocation10 [shape = 'u8[65536]{0}', space=vmem, size = 0x10000, scoped, tag = 'input window, operand 5, single buffered']
    #allocation11 [shape = 'u8[4096]{0}', space=vmem, size = 0x1000, scoped, tag = 'output window, operand 0, single buffered']
    %12 = vsyncpa [#allocation3], 0
    %13 = vsyncpa [#allocation6], 0
    %14 = vsyncpa [#allocation9], 0
    %15 = vsyncpa [#allocation4], 0
    // Predicated region
    $region2: #{tpu_custom_call.1} parent=1 // pred_check
      _
    $region3: #{tpu_custom_call.1} parent=1 // pred_check_branch
      %17 = sbr.rel (0) target = $region5
    $region4: #{tpu_custom_call.1} parent=1 // pred_region
      %19 = vsyncadd [#allocation3], 0
      %s20 = sshll.u32 %s0, 4
      %s21 = int_to_ptr.hbm [resolvable:$true] %s20
      %s22 = sshll.u32 [#allocation2], 4
      %s23 = int_to_ptr.vmem [resolvable:$true] %s22
      %28 = dma.hbm_to_vmem [thread:$0]  %s21, 128, %s23, [#allocation3], 64, 64, 4
    $region5: #{tpu_custom_call.1} parent=1 // pred_fallthru
      _
    // Predicated region
    $region6: #{tpu_custom_call.1} parent=1 // pred_check
      _
    $region7: #{tpu_custom_call.1} parent=1 // pred_check_branch
      %30 = sbr.rel (0) target = $region9
    $region8: #{tpu_custom_call.1} parent=1 // pred_region
      %32 = vsyncadd [#allocation6], 0
      %s33 = sshll.u32 %s1, 4
      %s34 = int_to_ptr.hbm [resolvable:$true] %s33
      %s35 = sshll.u32 [#allocation5], 4
      %s36 = int_to_ptr.vmem [resolvable:$true] %s35
      %41 = dma.hbm_to_vmem [thread:$0]  %s34, 512, %s36, [#allocation6], 128, 128, 8
    $region9: #{tpu_custom_call.1} parent=1 // pred_fallthru
      _
    // Predicated region
    $region10: #{tpu_custom_call.1} parent=1 // pred_check
      _
    $region11: #{tpu_custom_call.1} parent=1 // pred_check_branch
      %43 = sbr.rel (0) target = $region13
    $region12: #{tpu_custom_call.1} parent=1 // pred_region
      %45 = vsyncadd [#allocation6], 0
      %s47 = sshll.u32 %s2, 4
      %s48 = int_to_ptr.hbm [resolvable:$true] %s47
      %s49 = sshll.u32 [#allocation7], 4
      %s50 = int_to_ptr.vmem [resolvable:$true] %s49
      %52 = dma.hbm_to_vmem [thread:$0]  %s48, 32, %s50, [#allocation6]
    $region13: #{tpu_custom_call.1} parent=1 // pred_fallthru
      _
    // Predicated region
    $region14: #{tpu_custom_call.1} parent=1 // pred_check
      _
    $region15: #{tpu_custom_call.1} parent=1 // pred_check_branch
      %54 = sbr.rel (0) target = $region17
    $region16: #{tpu_custom_call.1} parent=1 // pred_region
      %56 = vsyncadd [#allocation9], 0
      %s57 = sshll.u32 %s3, 4
      %s58 = int_to_ptr.hbm [resolvable:$true] %s57
      %s59 = sshll.u32 [#allocation8], 4
      %s60 = int_to_ptr.vmem [resolvable:$true] %s59
      %65 = dma.hbm_to_vmem [thread:$0]  %s58, 4096, %s60, [#allocation9], 128, 128, 8
    $region17: #{tpu_custom_call.1} parent=1 // pred_fallthru
      _
    // Predicated region
    $region18: #{tpu_custom_call.1} parent=1 // pred_check
      _
    $region19: #{tpu_custom_call.1} parent=1 // pred_check_branch
      %67 = sbr.rel (0) target = $region21
    $region20: #{tpu_custom_call.1} parent=1 // pred_region
      _
    $region21: #{tpu_custom_call.1} parent=1 // pred_fallthru
      _
    // Predicated region
    $region22: #{tpu_custom_call.1} parent=1 // pred_check
      _
    $region23: #{tpu_custom_call.1} parent=1 // pred_check_branch
      %69 = sbr.rel (0) target = $region25
    $region24: #{tpu_custom_call.1} parent=1 // pred_region
      %71 = vsyncadd [#allocation9], 0
      %s72 = sshll.u32 %s5, 4
      %s73 = int_to_ptr.hbm [resolvable:$true] %s72
      %s74 = sshll.u32 [#allocation10], 4
      %s75 = int_to_ptr.vmem [resolvable:$true] %s74
      %80 = dma.hbm_to_vmem [thread:$0]  %s73, 2048, %s75, [#allocation9], 64, 64, 4
    $region25: #{tpu_custom_call.1} parent=1 // pred_fallthru
      _
    // Predicated region
    $region26: #{tpu_custom_call.1} parent=1 // pred_check
      _
    $region27: #{tpu_custom_call.1} parent=1 // pred_check_branch
      %82 = sbr.rel (0) target = $region29
    $region28: #{tpu_custom_call.1} parent=1 // pred_region
      _
    $region29: #{tpu_custom_call.1} parent=1 // pred_fallthru
      _
    // Predicated region
    $region30: #{tpu_custom_call.1} parent=1 // pred_check
      _
    $region31: #{tpu_custom_call.1} parent=1 // pred_check_branch
      %84 = sbr.rel (0) target = $region33
    $region32: #{tpu_custom_call.1} parent=1 // pred_region
      %86 = dma.done [#allocation3], 128
    $region33: #{tpu_custom_call.1} parent=1 // pred_fallthru
      _
    // Predicated region
    $region34: #{tpu_custom_call.1} parent=1 // pred_check
      _
    $region35: #{tpu_custom_call.1} parent=1 // pred_check_branch
      %88 = sbr.rel (0) target = $region37
    $region36: #{tpu_custom_call.1} parent=1 // pred_region
      %90 = dma.done [#allocation6], 512
    $region37: #{tpu_custom_call.1} parent=1 // pred_fallthru
      _
    // Predicated region
    $region38: #{tpu_custom_call.1} parent=1 // pred_check
      _
    $region39: #{tpu_custom_call.1} parent=1 // pred_check_branch
      %92 = sbr.rel (0) target = $region41
    $region40: #{tpu_custom_call.1} parent=1 // pred_region
      %94 = dma.done [#allocation6], 32
    $region41: #{tpu_custom_call.1} parent=1 // pred_fallthru
      _
    // Predicated region
    $region42: #{tpu_custom_call.1} parent=1 // pred_check
      _
    $region43: #{tpu_custom_call.1} parent=1 // pred_check_branch
      %96 = sbr.rel (0) target = $region45
    $region44: #{tpu_custom_call.1} parent=1 // pred_region
      %98 = dma.done [#allocation9], 4096
    $region45: #{tpu_custom_call.1} parent=1 // pred_fallthru
      _
    // Predicated region
    $region46: #{tpu_custom_call.1} parent=1 // pred_check
      _
    $region47: #{tpu_custom_call.1} parent=1 // pred_check_branch
      %100 = sbr.rel (0) target = $region49
    $region48: #{tpu_custom_call.1} parent=1 // pred_region
      %102 = dma.done [#allocation9], 2048
    $region49: #{tpu_custom_call.1} parent=1 // pred_fallthru
      _
    %v104 = vld [vmem:[#allocation2] sm:$0xf]
    %v105 = vld [vmem:[#allocation2 + $0x4] sm:$0xf]
    %v106 = vld [vmem:[#allocation5] sm:$0xff]
    %v107 = vld [vmem:[#allocation5 + $0x8] sm:$0xff]
    %v108 = vld [vmem:[#allocation5 + $0x10] sm:$0xff]
    %v109 = vld [vmem:[#allocation5 + $0x18] sm:$0xff]
    %v110 = vld [vmem:[#allocation7] sm:$0x3]
    %v112 = vperm.slane %v110, 0
    %v113 = vperm.slane %v110, 1
    %v118 = vunpack.c.l.b16 %v104
    %v119 = vunpack.c.l.b16 %v105
    %v120 = vpack.c.b16 %v119, %v118
    %v125 = vunpack.c.l.b16 %v106
    %v126 = vunpack.c.h.b16 %v106
    %v127 = vunpack.c.l.b16 %v107
    %v128 = vunpack.c.h.b16 %v107
    %v129 = vunpack.c.l.b16 %v108
    %v130 = vunpack.c.h.b16 %v108
    %v131 = vunpack.c.l.b16 %v109
    %v132 = vunpack.c.h.b16 %v109
    %v133 = vpack.c.b16 %v127, %v125
    %v134 = vpack.c.b16 %v128, %v126
    %v135 = vpack.c.b16 %v131, %v129
    %v136 = vpack.c.b16 %v132, %v130
    %vm141 = vcmask 261120
    %v143 = vsel %vm141, %v120, 0
    %145 = vmatpush.bf16.msra.mxu0 0
    %146 = vmatpush.bf16.msra.mxu0 0
    %147 = vmatpush.bf16.msra.mxu0 0
    %148 = vmatpush.bf16.msra.mxu0 0
    %149 = vmatpush.bf16.msra.mxu0 0
    %150 = vmatpush.bf16.msra.mxu0 0
    %151 = vmatpush.bf16.msra.mxu0 %v135
    %152 = vmatpush.bf16.msra.mxu0 %v133
    %153 = vmatmul.bf16.gmra.mxu0 %v143
    %v154 = vpop.f32.mrf.mxu0
    %v155 = vadd.f32 %v112, %v154
    %v156 = vpop.f32.mrf.mxu0
    %v157 = vadd.f32 %v112, %v156
    %158 = vdwg.mxu0
    %159 = vmatpush.bf16.msra.mxu0 0
    %160 = vmatpush.bf16.msra.mxu0 0
    %161 = vmatpush.bf16.msra.mxu0 0
    %162 = vmatpush.bf16.msra.mxu0 0
    %163 = vmatpush.bf16.msra.mxu0 0
    %164 = vmatpush.bf16.msra.mxu0 0
    %165 = vmatpush.bf16.msra.mxu0 %v136
    %166 = vmatpush.bf16.msra.mxu0 %v134
    %167 = vmatmul.bf16.gmra.mxu0 %v143
    %v168 = vpop.f32.mrf.mxu0
    %v169 = vadd.f32 %v113, %v168
    %v170 = vpop.f32.mrf.mxu0
    %v171 = vadd.f32 %v113, %v170
    %172 = vdwg.mxu0
    %v173 = vmax.f32 %v155, 0.0
    %v174 = vmax.f32 %v169, 0.0
    %v175 = vmax.f32 %v157, 0.0
    %v176 = vmax.f32 %v171, 0.0
    %v177 = vpack.c.bf16 %v175, %v173
    %v178 = vpack.c.bf16 %v176, %v174
    %v179 = vld [vmem:[#allocation8] sm:$0xff]
    %v180 = vld [vmem:[#allocation8 + $0x8] sm:$0xff]
    %v181 = vld [vmem:[#allocation8 + $0x10] sm:$0xff]
    %v182 = vld [vmem:[#allocation8 + $0x18] sm:$0xff]
    %v183 = vld [vmem:[#allocation8 + $0x20] sm:$0xff]
    %v184 = vld [vmem:[#allocation8 + $0x28] sm:$0xff]
    %v185 = vld [vmem:[#allocation8 + $0x30] sm:$0xff]
    %v186 = vld [vmem:[#allocation8 + $0x38] sm:$0xff]
    %v187 = vld [vmem:[#allocation8 + $0x40] sm:$0xff]
    %v188 = vld [vmem:[#allocation8 + $0x48] sm:$0xff]
    %v189 = vld [vmem:[#allocation8 + $0x50] sm:$0xff]
    %v190 = vld [vmem:[#allocation8 + $0x58] sm:$0xff]
    %v191 = vld [vmem:[#allocation8 + $0x60] sm:$0xff]
    %v192 = vld [vmem:[#allocation8 + $0x68] sm:$0xff]
    %v193 = vld [vmem:[#allocation8 + $0x70] sm:$0xff]
    %v194 = vld [vmem:[#allocation8 + $0x78] sm:$0xff]
    %v195 = vld [vmem:[#allocation8 + $0x80] sm:$0xff]
    %v196 = vld [vmem:[#allocation8 + $0x88] sm:$0xff]
    %v197 = vld [vmem:[#allocation8 + $0x90] sm:$0xff]
    %v198 = vld [vmem:[#allocation8 + $0x98] sm:$0xff]
    %v199 = vld [vmem:[#allocation8 + $0xa0] sm:$0xff]
    %v200 = vld [vmem:[#allocation8 + $0xa8] sm:$0xff]
    %v201 = vld [vmem:[#allocation8 + $0xb0] sm:$0xff]
    %v202 = vld [vmem:[#allocation8 + $0xb8] sm:$0xff]
    %v203 = vld [vmem:[#allocation8 + $0xc0] sm:$0xff]
    %v204 = vld [vmem:[#allocation8 + $0xc8] sm:$0xff]
    %v205 = vld [vmem:[#allocation8 + $0xd0] sm:$0xff]
    %v206 = vld [vmem:[#allocation8 + $0xd8] sm:$0xff]
    %v207 = vld [vmem:[#allocation8 + $0xe0] sm:$0xff]
    %v208 = vld [vmem:[#allocation8 + $0xe8] sm:$0xff]
    %v209 = vld [vmem:[#allocation8 + $0xf0] sm:$0xff]
    %v210 = vld [vmem:[#allocation8 + $0xf8] sm:$0xff]
    %v211 = vld [vmem:[%s4] sm:$0x3]
    %v213 = vperm.slane %v211, 0
    %v214 = vperm.slane %v211, 1
    %v249 = vunpack.c.l.b16 %v179
    %v250 = vunpack.c.h.b16 %v179
    %v251 = vunpack.c.l.b16 %v180
    %v252 = vunpack.c.h.b16 %v180
    %v253 = vunpack.c.l.b16 %v181
    %v254 = vunpack.c.h.b16 %v181
    %v255 = vunpack.c.l.b16 %v182
    %v256 = vunpack.c.h.b16 %v182
    %v257 = vunpack.c.l.b16 %v183
    %v258 = vunpack.c.h.b16 %v183
    %v259 = vunpack.c.l.b16 %v184
    %v260 = vunpack.c.h.b16 %v184
    %v261 = vunpack.c.l.b16 %v185
    %v262 = vunpack.c.h.b16 %v185
    %v263 = vunpack.c.l.b16 %v186
    %v264 = vunpack.c.h.b16 %v186
    %v265 = vunpack.c.l.b16 %v187
    %v266 = vunpack.c.h.b16 %v187
    %v267 = vunpack.c.l.b16 %v188
    %v268 = vunpack.c.h.b16 %v188
    %v269 = vunpack.c.l.b16 %v189
    %v270 = vunpack.c.h.b16 %v189
    %v271 = vunpack.c.l.b16 %v190
    %v272 = vunpack.c.h.b16 %v190
    %v273 = vunpack.c.l.b16 %v191
    %v274 = vunpack.c.h.b16 %v191
    %v275 = vunpack.c.l.b16 %v192
    %v276 = vunpack.c.h.b16 %v192
    %v277 = vunpack.c.l.b16 %v193
    %v278 = vunpack.c.h.b16 %v193
    %v279 = vunpack.c.l.b16 %v194
    %v280 = vunpack.c.h.b16 %v194
    %v281 = vunpack.c.l.b16 %v195
    %v282 = vunpack.c.h.b16 %v195
    %v283 = vunpack.c.l.b16 %v196
    %v284 = vunpack.c.h.b16 %v196
    %v285 = vunpack.c.l.b16 %v197
    %v286 = vunpack.c.h.b16 %v197
    %v287 = vunpack.c.l.b16 %v198
    %v288 = vunpack.c.h.b16 %v198
    %v289 = vunpack.c.l.b16 %v199
    %v290 = vunpack.c.h.b16 %v199
    %v291 = vunpack.c.l.b16 %v200
    %v292 = vunpack.c.h.b16 %v200
    %v293 = vunpack.c.l.b16 %v201
    %v294 = vunpack.c.h.b16 %v201
    %v295 = vunpack.c.l.b16 %v202
    %v296 = vunpack.c.h.b16 %v202
    %v297 = vunpack.c.l.b16 %v203
    %v298 = vunpack.c.h.b16 %v203
    %v299 = vunpack.c.l.b16 %v204
    %v300 = vunpack.c.h.b16 %v204
    %v301 = vunpack.c.l.b16 %v205
    %v302 = vunpack.c.h.b16 %v205
    %v303 = vunpack.c.l.b16 %v206
    %v304 = vunpack.c.h.b16 %v206
    %v305 = vunpack.c.l.b16 %v207
    %v306 = vunpack.c.h.b16 %v207
    %v307 = vunpack.c.l.b16 %v208
    %v308 = vunpack.c.h.b16 %v208
    %v309 = vunpack.c.l.b16 %v209
    %v310 = vunpack.c.h.b16 %v209
    %v311 = vunpack.c.l.b16 %v210
    %v312 = vunpack.c.h.b16 %v210
    %v313 = vpack.c.b16 %v251, %v249
    %v314 = vpack.c.b16 %v252, %v250
    %v315 = vpack.c.b16 %v255, %v253
    %v316 = vpack.c.b16 %v256, %v254
    %v317 = vpack.c.b16 %v259, %v257
    %v318 = vpack.c.b16 %v260, %v258
    %v319 = vpack.c.b16 %v263, %v261
    %v320 = vpack.c.b16 %v264, %v262
    %v321 = vpack.c.b16 %v267, %v265
    %v322 = vpack.c.b16 %v268, %v266
    %v323 = vpack.c.b16 %v271, %v269
    %v324 = vpack.c.b16 %v272, %v270
    %v325 = vpack.c.b16 %v275, %v273
    %v326 = vpack.c.b16 %v276, %v274
    %v327 = vpack.c.b16 %v279, %v277
    %v328 = vpack.c.b16 %v280, %v278
    %v329 = vpack.c.b16 %v283, %v281
    %v330 = vpack.c.b16 %v284, %v282
    %v331 = vpack.c.b16 %v287, %v285
    %v332 = vpack.c.b16 %v288, %v286
    %v333 = vpack.c.b16 %v291, %v289
    %v334 = vpack.c.b16 %v292, %v290
    %v335 = vpack.c.b16 %v295, %v293
    %v336 = vpack.c.b16 %v296, %v294
    %v337 = vpack.c.b16 %v299, %v297
    %v338 = vpack.c.b16 %v300, %v298
    %v339 = vpack.c.b16 %v303, %v301
    %v340 = vpack.c.b16 %v304, %v302
    %v341 = vpack.c.b16 %v307, %v305
    %v342 = vpack.c.b16 %v308, %v306
    %v343 = vpack.c.b16 %v311, %v309
    %v344 = vpack.c.b16 %v312, %v310
    %377 = vmatpush.bf16.msra.mxu0 %v327
    %378 = vmatpush.bf16.msra.mxu0 %v325
    %379 = vmatpush.bf16.msra.mxu0 %v323
    %380 = vmatpush.bf16.msra.mxu0 %v321
    %381 = vmatpush.bf16.msra.mxu0 %v319
    %382 = vmatpush.bf16.msra.mxu0 %v317
    %383 = vmatpush.bf16.msra.mxu0 %v315
    %384 = vmatpush.bf16.msra.mxu0 %v313
    %385 = vmatmul.bf16.gmra.mxu0 %v177
    %v386 = vpop.f32.mrf.mxu0
    %v387 = vadd.f32 %v213, %v386
    %v388 = vpop.f32.mrf.mxu0
    %v389 = vadd.f32 %v213, %v388
    %390 = vdwg.mxu0
    %391 = vmatpush.bf16.msra.mxu0 %v343
    %392 = vmatpush.bf16.msra.mxu0 %v341
    %393 = vmatpush.bf16.msra.mxu0 %v339
    %394 = vmatpush.bf16.msra.mxu0 %v337
    %395 = vmatpush.bf16.msra.mxu0 %v335
    %396 = vmatpush.bf16.msra.mxu0 %v333
    %397 = vmatpush.bf16.msra.mxu0 %v331
    %398 = vmatpush.bf16.msra.mxu0 %v329
    %399 = vmatmul.bf16.gmra.mxu0 %v178
    %v400 = vpop.f32.mrf.mxu0
    %v401 = vadd.f32 %v387, %v400
    %v402 = vpop.f32.mrf.mxu0
    %v403 = vadd.f32 %v389, %v402
    %404 = vdwg.mxu0
    %405 = vmatpush.bf16.msra.mxu0 %v328
    %406 = vmatpush.bf16.msra.mxu0 %v326
    %407 = vmatpush.bf16.msra.mxu0 %v324
    %408 = vmatpush.bf16.msra.mxu0 %v322
    %409 = vmatpush.bf16.msra.mxu0 %v320
    %410 = vmatpush.bf16.msra.mxu0 %v318
    %411 = vmatpush.bf16.msra.mxu0 %v316
    %412 = vmatpush.bf16.msra.mxu0 %v314
    %413 = vmatmul.bf16.gmra.mxu0 %v177
    %v414 = vpop.f32.mrf.mxu0
    %v415 = vadd.f32 %v214, %v414
    %v416 = vpop.f32.mrf.mxu0
    %v417 = vadd.f32 %v214, %v416
    %418 = vdwg.mxu0
    %419 = vmatpush.bf16.msra.mxu0 %v344
    %420 = vmatpush.bf16.msra.mxu0 %v342
    %421 = vmatpush.bf16.msra.mxu0 %v340
    %422 = vmatpush.bf16.msra.mxu0 %v338
    %423 = vmatpush.bf16.msra.mxu0 %v336
    %424 = vmatpush.bf16.msra.mxu0 %v334
    %425 = vmatpush.bf16.msra.mxu0 %v332
    %426 = vmatpush.bf16.msra.mxu0 %v330
    %427 = vmatmul.bf16.gmra.mxu0 %v178
    %v428 = vpop.f32.mrf.mxu0
    %v429 = vadd.f32 %v415, %v428
    %v430 = vpop.f32.mrf.mxu0
    %v431 = vadd.f32 %v417, %v430
    %432 = vdwg.mxu0
    %v433 = vmax.f32 %v401, 0.0
    %v434 = vmax.f32 %v429, 0.0
    %v435 = vmax.f32 %v403, 0.0
    %v436 = vmax.f32 %v431, 0.0
    %v437 = vpack.c.bf16 %v435, %v433
    %v438 = vpack.c.bf16 %v436, %v434
    %v439 = vld [vmem:[#allocation10] sm:$0xf]
    %v440 = vld [vmem:[#allocation10 + $0x4] sm:$0xf]
    %v441 = vld [vmem:[#allocation10 + $0x8] sm:$0xf]
    %v442 = vld [vmem:[#allocation10 + $0xc] sm:$0xf]
    %v443 = vld [vmem:[#allocation10 + $0x10] sm:$0xf]
    %v444 = vld [vmem:[#allocation10 + $0x14] sm:$0xf]
    %v445 = vld [vmem:[#allocation10 + $0x18] sm:$0xf]
    %v446 = vld [vmem:[#allocation10 + $0x1c] sm:$0xf]
    %v447 = vld [vmem:[#allocation10 + $0x20] sm:$0xf]
    %v448 = vld [vmem:[#allocation10 + $0x24] sm:$0xf]
    %v449 = vld [vmem:[#allocation10 + $0x28] sm:$0xf]
    %v450 = vld [vmem:[#allocation10 + $0x2c] sm:$0xf]
    %v451 = vld [vmem:[#allocation10 + $0x30] sm:$0xf]
    %v452 = vld [vmem:[#allocation10 + $0x34] sm:$0xf]
    %v453 = vld [vmem:[#allocation10 + $0x38] sm:$0xf]
    %v454 = vld [vmem:[#allocation10 + $0x3c] sm:$0xf]
    %v455 = vld [vmem:[#allocation10 + $0x40] sm:$0xf]
    %v456 = vld [vmem:[#allocation10 + $0x44] sm:$0xf]
    %v457 = vld [vmem:[#allocation10 + $0x48] sm:$0xf]
    %v458 = vld [vmem:[#allocation10 + $0x4c] sm:$0xf]
    %v459 = vld [vmem:[#allocation10 + $0x50] sm:$0xf]
    %v460 = vld [vmem:[#allocation10 + $0x54] sm:$0xf]
    %v461 = vld [vmem:[#allocation10 + $0x58] sm:$0xf]
    %v462 = vld [vmem:[#allocation10 + $0x5c] sm:$0xf]
    %v463 = vld [vmem:[#allocation10 + $0x60] sm:$0xf]
    %v464 = vld [vmem:[#allocation10 + $0x64] sm:$0xf]
    %v465 = vld [vmem:[#allocation10 + $0x68] sm:$0xf]
    %v466 = vld [vmem:[#allocation10 + $0x6c] sm:$0xf]
    %v467 = vld [vmem:[#allocation10 + $0x70] sm:$0xf]
    %v468 = vld [vmem:[#allocation10 + $0x74] sm:$0xf]
    %v469 = vld [vmem:[#allocation10 + $0x78] sm:$0xf]
    %v470 = vld [vmem:[#allocation10 + $0x7c] sm:$0xf]
    %v471 = vld [vmem:[%s6] sm:$0x1]
    %v473 = vperm.slane %v471, 0
    %v507 = vunpack.c.l.b16 %v439
    %v508 = vunpack.c.l.b16 %v440
    %v509 = vunpack.c.l.b16 %v441
    %v510 = vunpack.c.l.b16 %v442
    %v511 = vunpack.c.l.b16 %v443
    %v512 = vunpack.c.l.b16 %v444
    %v513 = vunpack.c.l.b16 %v445
    %v514 = vunpack.c.l.b16 %v446
    %v515 = vunpack.c.l.b16 %v447
    %v516 = vunpack.c.l.b16 %v448
    %v517 = vunpack.c.l.b16 %v449
    %v518 = vunpack.c.l.b16 %v450
    %v519 = vunpack.c.l.b16 %v451
    %v520 = vunpack.c.l.b16 %v452
    %v521 = vunpack.c.l.b16 %v453
    %v522 = vunpack.c.l.b16 %v454
    %v523 = vunpack.c.l.b16 %v455
    %v524 = vunpack.c.l.b16 %v456
    %v525 = vunpack.c.l.b16 %v457
    %v526 = vunpack.c.l.b16 %v458
    %v527 = vunpack.c.l.b16 %v459
    %v528 = vunpack.c.l.b16 %v460
    %v529 = vunpack.c.l.b16 %v461
    %v530 = vunpack.c.l.b16 %v462
    %v531 = vunpack.c.l.b16 %v463
    %v532 = vunpack.c.l.b16 %v464
    %v533 = vunpack.c.l.b16 %v465
    %v534 = vunpack.c.l.b16 %v466
    %v535 = vunpack.c.l.b16 %v467
    %v536 = vunpack.c.l.b16 %v468
    %v537 = vunpack.c.l.b16 %v469
    %v538 = vunpack.c.l.b16 %v470
    %v539 = vpack.c.b16 %v508, %v507
    %v540 = vpack.c.b16 %v510, %v509
    %v541 = vpack.c.b16 %v512, %v511
    %v542 = vpack.c.b16 %v514, %v513
    %v543 = vpack.c.b16 %v516, %v515
    %v544 = vpack.c.b16 %v518, %v517
    %v545 = vpack.c.b16 %v520, %v519
    %v546 = vpack.c.b16 %v522, %v521
    %v547 = vpack.c.b16 %v524, %v523
    %v548 = vpack.c.b16 %v526, %v525
    %v549 = vpack.c.b16 %v528, %v527
    %v550 = vpack.c.b16 %v530, %v529
    %v551 = vpack.c.b16 %v532, %v531
    %v552 = vpack.c.b16 %v534, %v533
    %v553 = vpack.c.b16 %v536, %v535
    %v554 = vpack.c.b16 %v538, %v537
    %571 = vmatpush.bf16.msra.mxu0 %v546
    %572 = vmatpush.bf16.msra.mxu0 %v545
    %573 = vmatpush.bf16.msra.mxu0 %v544
    %574 = vmatpush.bf16.msra.mxu0 %v543
    %575 = vmatpush.bf16.msra.mxu0 %v542
    %576 = vmatpush.bf16.msra.mxu0 %v541
    %577 = vmatpush.bf16.msra.mxu0 %v540
    %578 = vmatpush.bf16.msra.mxu0 %v539
    %579 = vmatmul.bf16.gmra.mxu0 %v437
    %v580 = vpop.f32.mrf.mxu0
    %v581 = vadd.f32 %v473, %v580
    %v582 = vpop.f32.mrf.mxu0
    %v583 = vadd.f32 %v473, %v582
    %584 = vdwg.mxu0
    %585 = vmatpush.bf16.msra.mxu0 %v554
    %586 = vmatpush.bf16.msra.mxu0 %v553
    %587 = vmatpush.bf16.msra.mxu0 %v552
    %588 = vmatpush.bf16.msra.mxu0 %v551
    %589 = vmatpush.bf16.msra.mxu0 %v550
    %590 = vmatpush.bf16.msra.mxu0 %v549
    %591 = vmatpush.bf16.msra.mxu0 %v548
    %592 = vmatpush.bf16.msra.mxu0 %v547
    %593 = vmatmul.bf16.gmra.mxu0 %v438
    %v594 = vpop.f32.mrf.mxu0
    %v595 = vadd.f32 %v581, %v594
    %v596 = vpop.f32.mrf.mxu0
    %v597 = vadd.f32 %v583, %v596
    %598 = vdwg.mxu0
    %v599 = vtanh.pop %v595
    %v600 = vtanh.pop %v597
    %v601 = vmul.f32 %v599, 2.0
    %v602 = vmul.f32 %v600, 2.0
    %v603 = vpack.c.bf16 %v601, %v601
    %v604 = vpack.c.bf16 %v602, %v602
    %605 = vst [vmem:[#allocation11] sm:$0xf] %v603
    %606 = vst [vmem:[#allocation11 + $0x4] sm:$0xf] %v604
    // Predicated region
    $region50: #{tpu_custom_call.1} parent=1 // pred_check
      _
    $region51: #{tpu_custom_call.1} parent=1 // pred_check_branch
      %608 = sbr.rel (0) target = $region53
    $region52: #{tpu_custom_call.1} parent=1 // pred_region
      %610 = vsyncadd [#allocation4], 0
      %s611 = sshll.u32 [#allocation11], 4
      %s612 = int_to_ptr.vmem [resolvable:$true] %s611
      %s613 = sshll.u32 %s7, 4
      %s614 = int_to_ptr.hbm [resolvable:$true] %s613
      %619 = dma.vmem_to_hbm [thread:$0]  %s612, 128, %s614, [#allocation4], 64, 64, 4
    $region53: #{tpu_custom_call.1} parent=1 // pred_fallthru
      _
    // Predicated region
    $region54: #{tpu_custom_call.1} parent=1 // pred_check
      _
    $region55: #{tpu_custom_call.1} parent=1 // pred_check_branch
      %621 = sbr.rel (0) target = $region57
    $region56: #{tpu_custom_call.1} parent=1 // pred_region
      %623 = dma.done [#allocation4], 128
    $region57: #{tpu_custom_call.1} parent=1 // pred_fallthru
      _
    %624 = vsyncpa [#allocation3], 1
    %625 = vsyncpa [#allocation6], 1
    %626 = vsyncpa [#allocation9], 1
    %627 = vsyncpa [#allocation4], 1

// kernel: tpu_custom_call.1
$region0: #{tpu_custom_call.1}
  #allocation0 [shape = 'u32[]', space=smem, size = 0x4, offset = 0x4, fixed_abs, tag = 'smem constant byte address 0x4 - core index']
  #allocation1 [shape = 'u32[72,128]{1,0:T(1,128)}', space=vmem, size = 0x9000, scoped, tag = 'internal scratch']
  %s0 = inlined_call_operand.hbm [shape: bf16[16,32], index: 0, kind: input, shape index: {}]
  %s1 = inlined_call_operand.hbm [shape: bf16[32,256], index: 1, kind: input, shape index: {}]
  %s2 = inlined_call_operand.hbm [shape: f32[1,256], index: 2, kind: input, shape index: {}]
  %s3 = inlined_call_operand.hbm [shape: bf16[256,256], index: 3, kind: input, shape index: {}]
  %s4 = inlined_call_operand.vmem [shape: f32[1,256], index: 4, kind: input, shape index: {}]
  %s5 = inlined_call_operand.hbm [shape: bf16[256,128], index: 5, kind: input, shape index: {}]
  %s6 = inlined_call_operand.vmem [shape: f32[1,128], index: 6, kind: input, shape index: {}]
  %s7 = inlined_call_operand.hbm [shape: bf16[16,128], index: 7, kind: output, shape index: {}]
  %s8 = sld [smem:[#allocation0]]
  $region58: #{tpu_custom_call.1} parent=0
    _
  %s10 = ssub.s32 1, %s8
  %s11 = scalar_select 0, %s10, %s8
  $region1: #{tpu_custom_call.1} parent=0
    #allocation2 [shape = 'u8[4096]{0}', space=vmem, size = 0x1000, scoped, tag = 'input window, operand 0, single buffered']
    #allocation3 [shape = 's32[1]{0}', space=sflag, size = 0x4, scoped, tag = 'scoped memory for tpu_custom_call.1']
    #allocation4 [shape = 's32[1]{0}', space=sflag, size = 0x4, scoped, tag = 'scoped memory for tpu_custom_call.1']
    #allocation5 [shape = 'u8[16384]{0}', space=vmem, size = 0x4000, scoped, tag = 'input window, operand 1, single buffered']
    #allocation6 [shape = 's32[1]{0}', space=sflag, size = 0x4, scoped, tag = 'scoped memory for tpu_custom_call.1']
    #allocation7 [shape = 'u8[1024]{0}', space=vmem, size = 0x400, scoped, tag = 'input window, operand 2, single buffered']
    #allocation8 [shape = 'u8[131072]{0}', space=vmem, size = 0x20000, scoped, tag = 'input window, operand 3, single buffered']
    #allocation9 [shape = 's32[1]{0}', space=sflag, size = 0x4, scoped, tag = 'scoped memory for tpu_custom_call.1']
    #allocation10 [shape = 'u8[65536]{0}', space=vmem, size = 0x10000, scoped, tag = 'input window, operand 5, single buffered']
    #allocation11 [shape = 'u8[4096]{0}', space=vmem, size = 0x1000, scoped, tag = 'output window, operand 0, single buffered']
    %12 = vsyncpa [#allocation3], 0
    %13 = vsyncpa [#allocation6], 0
    %14 = vsyncpa [#allocation9], 0
    %15 = vsyncpa [#allocation4], 0
    // Predicated region
    $region2: #{tpu_custom_call.1} parent=1 // pred_check
      _
    $region3: #{tpu_custom_call.1} parent=1 // pred_check_branch
      %17 = sbr.rel (0) target = $region5
    $region4: #{tpu_custom_call.1} parent=1 // pred_region
      %19 = vsyncadd [#allocation3], 0
      %s20 = sshll.u32 %s0, 4
      %s21 = int_to_ptr.hbm [resolvable:$true] %s20
      %s22 = sshll.u32 [#allocation2], 4
      %s23 = int_to_ptr.vmem [resolvable:$true] %s22
      %28 = dma.hbm_to_vmem [thread:$0]  %s21, 128, %s23, [#allocation3], 64, 64, 4
    $region5: #{tpu_custom_call.1} parent=1 // pred_fallthru
      _
    // Predicated region
    $region6: #{tpu_custom_call.1} parent=1 // pred_check
      _
    $region7: #{tpu_custom_call.1} parent=1 // pred_check_branch
      %30 = sbr.rel (0) target = $region9
    $region8: #{tpu_custom_call.1} parent=1 // pred_region
      %32 = vsyncadd [#allocation6], 0
      %s33 = sshll.u32 %s1, 4
      %s34 = int_to_ptr.hbm [resolvable:$true] %s33
      %s35 = sshll.u32 [#allocation5], 4
      %s36 = int_to_ptr.vmem [resolvable:$true] %s35
      %41 = dma.hbm_to_vmem [thread:$0]  %s34, 512, %s36, [#allocation6], 128, 128, 8
    $region9: #{tpu_custom_call.1} parent=1 // pred_fallthru
      _
    // Predicated region
    $region10: #{tpu_custom_call.1} parent=1 // pred_check
      _
    $region11: #{tpu_custom_call.1} parent=1 // pred_check_branch
      %43 = sbr.rel (0) target = $region13
    $region12: #{tpu_custom_call.1} parent=1 // pred_region
      %45 = vsyncadd [#allocation6], 0
      %s47 = sshll.u32 %s2, 4
      %s48 = int_to_ptr.hbm [resolvable:$true] %s47
      %s49 = sshll.u32 [#allocation7], 4
      %s50 = int_to_ptr.vmem [resolvable:$true] %s49
      %52 = dma.hbm_to_vmem [thread:$0]  %s48, 32, %s50, [#allocation6]
    $region13: #{tpu_custom_call.1} parent=1 // pred_fallthru
      _
    // Predicated region
    $region14: #{tpu_custom_call.1} parent=1 // pred_check
      _
    $region15: #{tpu_custom_call.1} parent=1 // pred_check_branch
      %54 = sbr.rel (0) target = $region17
    $region16: #{tpu_custom_call.1} parent=1 // pred_region
      %56 = vsyncadd [#allocation9], 0
      %s57 = sshll.u32 %s3, 4
      %s58 = int_to_ptr.hbm [resolvable:$true] %s57
      %s59 = sshll.u32 [#allocation8], 4
      %s60 = int_to_ptr.vmem [resolvable:$true] %s59
      %65 = dma.hbm_to_vmem [thread:$0]  %s58, 4096, %s60, [#allocation9], 128, 128, 8
    $region17: #{tpu_custom_call.1} parent=1 // pred_fallthru
      _
    // Predicated region
    $region18: #{tpu_custom_call.1} parent=1 // pred_check
      _
    $region19: #{tpu_custom_call.1} parent=1 // pred_check_branch
      %67 = sbr.rel (0) target = $region21
    $region20: #{tpu_custom_call.1} parent=1 // pred_region
      _
    $region21: #{tpu_custom_call.1} parent=1 // pred_fallthru
      _
    // Predicated region
    $region22: #{tpu_custom_call.1} parent=1 // pred_check
      _
    $region23: #{tpu_custom_call.1} parent=1 // pred_check_branch
      %69 = sbr.rel (0) target = $region25
    $region24: #{tpu_custom_call.1} parent=1 // pred_region
      %71 = vsyncadd [#allocation9], 0
      %s72 = sshll.u32 %s5, 4
      %s73 = int_to_ptr.hbm [resolvable:$true] %s72
      %s74 = sshll.u32 [#allocation10], 4
      %s75 = int_to_ptr.vmem [resolvable:$true] %s74
      %80 = dma.hbm_to_vmem [thread:$0]  %s73, 2048, %s75, [#allocation9], 64, 64, 4
    $region25: #{tpu_custom_call.1} parent=1 // pred_fallthru
      _
    // Predicated region
    $region26: #{tpu_custom_call.1} parent=1 // pred_check
      _
    $region27: #{tpu_custom_call.1} parent=1 // pred_check_branch
      %82 = sbr.rel (0) target = $region29
    $region28: #{tpu_custom_call.1} parent=1 // pred_region
      _
    $region29: #{tpu_custom_call.1} parent=1 // pred_fallthru
      _
    // Predicated region
    $region30: #{tpu_custom_call.1} parent=1 // pred_check
      _
    $region31: #{tpu_custom_call.1} parent=1 // pred_check_branch
      %84 = sbr.rel (0) target = $region33
    $region32: #{tpu_custom_call.1} parent=1 // pred_region
      %86 = dma.done [#allocation3], 128
    $region33: #{tpu_custom_call.1} parent=1 // pred_fallthru
      _
    // Predicated region
    $region34: #{tpu_custom_call.1} parent=1 // pred_check
      _
    $region35: #{tpu_custom_call.1} parent=1 // pred_check_branch
      %88 = sbr.rel (0) target = $region37
    $region36: #{tpu_custom_call.1} parent=1 // pred_region
      %90 = dma.done [#allocation6], 512
    $region37: #{tpu_custom_call.1} parent=1 // pred_fallthru
      _
    // Predicated region
    $region38: #{tpu_custom_call.1} parent=1 // pred_check
      _
    $region39: #{tpu_custom_call.1} parent=1 // pred_check_branch
      %92 = sbr.rel (0) target = $region41
    $region40: #{tpu_custom_call.1} parent=1 // pred_region
      %94 = dma.done [#allocation6], 32
    $region41: #{tpu_custom_call.1} parent=1 // pred_fallthru
      _
    // Predicated region
    $region42: #{tpu_custom_call.1} parent=1 // pred_check
      _
    $region43: #{tpu_custom_call.1} parent=1 // pred_check_branch
      %96 = sbr.rel (0) target = $region45
    $region44: #{tpu_custom_call.1} parent=1 // pred_region
      %98 = dma.done [#allocation9], 4096
    $region45: #{tpu_custom_call.1} parent=1 // pred_fallthru
      _
    // Predicated region
    $region46: #{tpu_custom_call.1} parent=1 // pred_check
      _
    $region47: #{tpu_custom_call.1} parent=1 // pred_check_branch
      %100 = sbr.rel (0) target = $region49
    $region48: #{tpu_custom_call.1} parent=1 // pred_region
      %102 = dma.done [#allocation9], 2048
    $region49: #{tpu_custom_call.1} parent=1 // pred_fallthru
      _
    %v104 = vld [vmem:[#allocation2] sm:$0xf]
    %v105 = vld [vmem:[#allocation2 + $0x4] sm:$0xf]
    %v106 = vld [vmem:[#allocation5] sm:$0xff]
    %v107 = vld [vmem:[#allocation5 + $0x8] sm:$0xff]
    %v108 = vld [vmem:[#allocation5 + $0x10] sm:$0xff]
    %v109 = vld [vmem:[#allocation5 + $0x18] sm:$0xff]
    %v110 = vld [vmem:[#allocation7] sm:$0x3]
    %v112 = vperm.slane %v110, 0
    %v113 = vperm.slane %v110, 1
    %v118 = vunpack.c.l.b16 %v104
    %v119 = vunpack.c.l.b16 %v105
    %v120 = vpack.c.b16 %v119, %v118
    %v125 = vunpack.c.l.b16 %v106
    %v126 = vunpack.c.h.b16 %v106
    %v127 = vunpack.c.l.b16 %v107
    %v128 = vunpack.c.h.b16 %v107
    %v129 = vunpack.c.l.b16 %v108
    %v130 = vunpack.c.h.b16 %v108
    %v131 = vunpack.c.l.b16 %v109
    %v132 = vunpack.c.h.b16 %v109
    %v133 = vpack.c.b16 %v127, %v125
    %v134 = vpack.c.b16 %v128, %v126
    %v135 = vpack.c.b16 %v131, %v129
    %v136 = vpack.c.b16 %v132, %v130
    %vm141 = vcmask 261120
    %v143 = vsel %vm141, %v120, 0
    %145 = vmatpush.bf16.msra.mxu0 0
    %146 = vmatpush.bf16.msra.mxu0 0
    %147 = vmatpush.bf16.msra.mxu0 0
    %148 = vmatpush.bf16.msra.mxu0 0
    %149 = vmatpush.bf16.msra.mxu0 0
    %150 = vmatpush.bf16.msra.mxu0 0
    %151 = vmatpush.bf16.msra.mxu0 %v135
    %152 = vmatpush.bf16.msra.mxu0 %v133
    %153 = vmatmul.bf16.gmra.mxu0 %v143
    %v154 = vpop.f32.mrf.mxu0
    %v155 = vadd.f32 %v112, %v154
    %v156 = vpop.f32.mrf.mxu0
    %v157 = vadd.f32 %v112, %v156
    %158 = vdwg.mxu0
    %159 = vmatpush.bf16.msra.mxu0 0
    %160 = vmatpush.bf16.msra.mxu0 0
    %161 = vmatpush.bf16.msra.mxu0 0
    %162 = vmatpush.bf16.msra.mxu0 0
    %163 = vmatpush.bf16.msra.mxu0 0
    %164 = vmatpush.bf16.msra.mxu0 0
    %165 = vmatpush.bf16.msra.mxu0 %v136
    %166 = vmatpush.bf16.msra.mxu0 %v134
    %167 = vmatmul.bf16.gmra.mxu0 %v143
    %v168 = vpop.f32.mrf.mxu0
    %v169 = vadd.f32 %v113, %v168
    %v170 = vpop.f32.mrf.mxu0
    %v171 = vadd.f32 %v113, %v170
    %172 = vdwg.mxu0
    %v173 = vmax.f32 %v155, 0.0
    %v174 = vmax.f32 %v169, 0.0
    %v175 = vmax.f32 %v157, 0.0
    %v176 = vmax.f32 %v171, 0.0
    %v177 = vpack.c.bf16 %v175, %v173
    %v178 = vpack.c.bf16 %v176, %v174
    %v179 = vld [vmem:[#allocation8] sm:$0xff]
    %v180 = vld [vmem:[#allocation8 + $0x8] sm:$0xff]
    %v181 = vld [vmem:[#allocation8 + $0x10] sm:$0xff]
    %v182 = vld [vmem:[#allocation8 + $0x18] sm:$0xff]
    %v183 = vld [vmem:[#allocation8 + $0x20] sm:$0xff]
    %v184 = vld [vmem:[#allocation8 + $0x28] sm:$0xff]
    %v185 = vld [vmem:[#allocation8 + $0x30] sm:$0xff]
    %v186 = vld [vmem:[#allocation8 + $0x38] sm:$0xff]
    %v187 = vld [vmem:[#allocation8 + $0x40] sm:$0xff]
    %v188 = vld [vmem:[#allocation8 + $0x48] sm:$0xff]
    %v189 = vld [vmem:[#allocation8 + $0x50] sm:$0xff]
    %v190 = vld [vmem:[#allocation8 + $0x58] sm:$0xff]
    %v191 = vld [vmem:[#allocation8 + $0x60] sm:$0xff]
    %v192 = vld [vmem:[#allocation8 + $0x68] sm:$0xff]
    %v193 = vld [vmem:[#allocation8 + $0x70] sm:$0xff]
    %v194 = vld [vmem:[#allocation8 + $0x78] sm:$0xff]
    %v195 = vld [vmem:[#allocation8 + $0x80] sm:$0xff]
    %v196 = vld [vmem:[#allocation8 + $0x88] sm:$0xff]
    %v197 = vld [vmem:[#allocation8 + $0x90] sm:$0xff]
    %v198 = vld [vmem:[#allocation8 + $0x98] sm:$0xff]
    %v199 = vld [vmem:[#allocation8 + $0xa0] sm:$0xff]
    %v200 = vld [vmem:[#allocation8 + $0xa8] sm:$0xff]
    %v201 = vld [vmem:[#allocation8 + $0xb0] sm:$0xff]
    %v202 = vld [vmem:[#allocation8 + $0xb8] sm:$0xff]
    %v203 = vld [vmem:[#allocation8 + $0xc0] sm:$0xff]
    %v204 = vld [vmem:[#allocation8 + $0xc8] sm:$0xff]
    %v205 = vld [vmem:[#allocation8 + $0xd0] sm:$0xff]
    %v206 = vld [vmem:[#allocation8 + $0xd8] sm:$0xff]
    %v207 = vld [vmem:[#allocation8 + $0xe0] sm:$0xff]
    %v208 = vld [vmem:[#allocation8 + $0xe8] sm:$0xff]
    %v209 = vld [vmem:[#allocation8 + $0xf0] sm:$0xff]
    %v210 = vld [vmem:[#allocation8 + $0xf8] sm:$0xff]
    %v211 = vld [vmem:[%s4] sm:$0x3]
    %v213 = vperm.slane %v211, 0
    %v214 = vperm.slane %v211, 1
    %v249 = vunpack.c.l.b16 %v179
    %v250 = vunpack.c.h.b16 %v179
    %v251 = vunpack.c.l.b16 %v180
    %v252 = vunpack.c.h.b16 %v180
    %v253 = vunpack.c.l.b16 %v181
    %v254 = vunpack.c.h.b16 %v181
    %v255 = vunpack.c.l.b16 %v182
    %v256 = vunpack.c.h.b16 %v182
    %v257 = vunpack.c.l.b16 %v183
    %v258 = vunpack.c.h.b16 %v183
    %v259 = vunpack.c.l.b16 %v184
    %v260 = vunpack.c.h.b16 %v184
    %v261 = vunpack.c.l.b16 %v185
    %v262 = vunpack.c.h.b16 %v185
    %v263 = vunpack.c.l.b16 %v186
    %v264 = vunpack.c.h.b16 %v186
    %v265 = vunpack.c.l.b16 %v187
    %v266 = vunpack.c.h.b16 %v187
    %v267 = vunpack.c.l.b16 %v188
    %v268 = vunpack.c.h.b16 %v188
    %v269 = vunpack.c.l.b16 %v189
    %v270 = vunpack.c.h.b16 %v189
    %v271 = vunpack.c.l.b16 %v190
    %v272 = vunpack.c.h.b16 %v190
    %v273 = vunpack.c.l.b16 %v191
    %v274 = vunpack.c.h.b16 %v191
    %v275 = vunpack.c.l.b16 %v192
    %v276 = vunpack.c.h.b16 %v192
    %v277 = vunpack.c.l.b16 %v193
    %v278 = vunpack.c.h.b16 %v193
    %v279 = vunpack.c.l.b16 %v194
    %v280 = vunpack.c.h.b16 %v194
    %v281 = vunpack.c.l.b16 %v195
    %v282 = vunpack.c.h.b16 %v195
    %v283 = vunpack.c.l.b16 %v196
    %v284 = vunpack.c.h.b16 %v196
    %v285 = vunpack.c.l.b16 %v197
    %v286 = vunpack.c.h.b16 %v197
    %v287 = vunpack.c.l.b16 %v198
    %v288 = vunpack.c.h.b16 %v198
    %v289 = vunpack.c.l.b16 %v199
    %v290 = vunpack.c.h.b16 %v199
    %v291 = vunpack.c.l.b16 %v200
    %v292 = vunpack.c.h.b16 %v200
    %v293 = vunpack.c.l.b16 %v201
    %v294 = vunpack.c.h.b16 %v201
    %v295 = vunpack.c.l.b16 %v202
    %v296 = vunpack.c.h.b16 %v202
    %v297 = vunpack.c.l.b16 %v203
    %v298 = vunpack.c.h.b16 %v203
    %v299 = vunpack.c.l.b16 %v204
    %v300 = vunpack.c.h.b16 %v204
    %v301 = vunpack.c.l.b16 %v205
    %v302 = vunpack.c.h.b16 %v205
    %v303 = vunpack.c.l.b16 %v206
    %v304 = vunpack.c.h.b16 %v206
    %v305 = vunpack.c.l.b16 %v207
    %v306 = vunpack.c.h.b16 %v207
    %v307 = vunpack.c.l.b16 %v208
    %v308 = vunpack.c.h.b16 %v208
    %v309 = vunpack.c.l.b16 %v209
    %v310 = vunpack.c.h.b16 %v209
    %v311 = vunpack.c.l.b16 %v210
    %v312 = vunpack.c.h.b16 %v210
    %v313 = vpack.c.b16 %v251, %v249
    %v314 = vpack.c.b16 %v252, %v250
    %v315 = vpack.c.b16 %v255, %v253
    %v316 = vpack.c.b16 %v256, %v254
    %v317 = vpack.c.b16 %v259, %v257
    %v318 = vpack.c.b16 %v260, %v258
    %v319 = vpack.c.b16 %v263, %v261
    %v320 = vpack.c.b16 %v264, %v262
    %v321 = vpack.c.b16 %v267, %v265
    %v322 = vpack.c.b16 %v268, %v266
    %v323 = vpack.c.b16 %v271, %v269
    %v324 = vpack.c.b16 %v272, %v270
    %v325 = vpack.c.b16 %v275, %v273
    %v326 = vpack.c.b16 %v276, %v274
    %v327 = vpack.c.b16 %v279, %v277
    %v328 = vpack.c.b16 %v280, %v278
    %v329 = vpack.c.b16 %v283, %v281
    %v330 = vpack.c.b16 %v284, %v282
    %v331 = vpack.c.b16 %v287, %v285
    %v332 = vpack.c.b16 %v288, %v286
    %v333 = vpack.c.b16 %v291, %v289
    %v334 = vpack.c.b16 %v292, %v290
    %v335 = vpack.c.b16 %v295, %v293
    %v336 = vpack.c.b16 %v296, %v294
    %v337 = vpack.c.b16 %v299, %v297
    %v338 = vpack.c.b16 %v300, %v298
    %v339 = vpack.c.b16 %v303, %v301
    %v340 = vpack.c.b16 %v304, %v302
    %v341 = vpack.c.b16 %v307, %v305
    %v342 = vpack.c.b16 %v308, %v306
    %v343 = vpack.c.b16 %v311, %v309
    %v344 = vpack.c.b16 %v312, %v310
    %377 = vmatpush.bf16.msra.mxu0 %v327
    %378 = vmatpush.bf16.msra.mxu0 %v325
    %379 = vmatpush.bf16.msra.mxu0 %v323
    %380 = vmatpush.bf16.msra.mxu0 %v321
    %381 = vmatpush.bf16.msra.mxu0 %v319
    %382 = vmatpush.bf16.msra.mxu0 %v317
    %383 = vmatpush.bf16.msra.mxu0 %v315
    %384 = vmatpush.bf16.msra.mxu0 %v313
    %385 = vmatmul.bf16.gmra.mxu0 %v177
    %v386 = vpop.f32.mrf.mxu0
    %v387 = vadd.f32 %v213, %v386
    %v388 = vpop.f32.mrf.mxu0
    %v389 = vadd.f32 %v213, %v388
    %390 = vdwg.mxu0
    %391 = vmatpush.bf16.msra.mxu0 %v343
    %392 = vmatpush.bf16.msra.mxu0 %v341
    %393 = vmatpush.bf16.msra.mxu0 %v339
    %394 = vmatpush.bf16.msra.mxu0 %v337
    %395 = vmatpush.bf16.msra.mxu0 %v335
    %396 = vmatpush.bf16.msra.mxu0 %v333
    %397 = vmatpush.bf16.msra.mxu0 %v331
    %398 = vmatpush.bf16.msra.mxu0 %v329
    %399 = vmatmul.bf16.gmra.mxu0 %v178
    %v400 = vpop.f32.mrf.mxu0
    %v401 = vadd.f32 %v387, %v400
    %v402 = vpop.f32.mrf.mxu0
    %v403 = vadd.f32 %v389, %v402
    %404 = vdwg.mxu0
    %405 = vmatpush.bf16.msra.mxu0 %v328
    %406 = vmatpush.bf16.msra.mxu0 %v326
    %407 = vmatpush.bf16.msra.mxu0 %v324
    %408 = vmatpush.bf16.msra.mxu0 %v322
    %409 = vmatpush.bf16.msra.mxu0 %v320
    %410 = vmatpush.bf16.msra.mxu0 %v318
    %411 = vmatpush.bf16.msra.mxu0 %v316
    %412 = vmatpush.bf16.msra.mxu0 %v314
    %413 = vmatmul.bf16.gmra.mxu0 %v177
    %v414 = vpop.f32.mrf.mxu0
    %v415 = vadd.f32 %v214, %v414
    %v416 = vpop.f32.mrf.mxu0
    %v417 = vadd.f32 %v214, %v416
    %418 = vdwg.mxu0
    %419 = vmatpush.bf16.msra.mxu0 %v344
    %420 = vmatpush.bf16.msra.mxu0 %v342
    %421 = vmatpush.bf16.msra.mxu0 %v340
    %422 = vmatpush.bf16.msra.mxu0 %v338
    %423 = vmatpush.bf16.msra.mxu0 %v336
    %424 = vmatpush.bf16.msra.mxu0 %v334
    %425 = vmatpush.bf16.msra.mxu0 %v332
    %426 = vmatpush.bf16.msra.mxu0 %v330
    %427 = vmatmul.bf16.gmra.mxu0 %v178
    %v428 = vpop.f32.mrf.mxu0
    %v429 = vadd.f32 %v415, %v428
    %v430 = vpop.f32.mrf.mxu0
    %v431 = vadd.f32 %v417, %v430
    %432 = vdwg.mxu0
    %v433 = vmax.f32 %v401, 0.0
    %v434 = vmax.f32 %v429, 0.0
    %v435 = vmax.f32 %v403, 0.0
    %v436 = vmax.f32 %v431, 0.0
    %v437 = vpack.c.bf16 %v435, %v433
    %v438 = vpack.c.bf16 %v436, %v434
    %v439 = vld [vmem:[#allocation10] sm:$0xf]
    %v440 = vld [vmem:[#allocation10 + $0x4] sm:$0xf]
    %v441 = vld [vmem:[#allocation10 + $0x8] sm:$0xf]
    %v442 = vld [vmem:[#allocation10 + $0xc] sm:$0xf]
    %v443 = vld [vmem:[#allocation10 + $0x10] sm:$0xf]
    %v444 = vld [vmem:[#allocation10 + $0x14] sm:$0xf]
    %v445 = vld [vmem:[#allocation10 + $0x18] sm:$0xf]
    %v446 = vld [vmem:[#allocation10 + $0x1c] sm:$0xf]
    %v447 = vld [vmem:[#allocation10 + $0x20] sm:$0xf]
    %v448 = vld [vmem:[#allocation10 + $0x24] sm:$0xf]
    %v449 = vld [vmem:[#allocation10 + $0x28] sm:$0xf]
    %v450 = vld [vmem:[#allocation10 + $0x2c] sm:$0xf]
    %v451 = vld [vmem:[#allocation10 + $0x30] sm:$0xf]
    %v452 = vld [vmem:[#allocation10 + $0x34] sm:$0xf]
    %v453 = vld [vmem:[#allocation10 + $0x38] sm:$0xf]
    %v454 = vld [vmem:[#allocation10 + $0x3c] sm:$0xf]
    %v455 = vld [vmem:[#allocation10 + $0x40] sm:$0xf]
    %v456 = vld [vmem:[#allocation10 + $0x44] sm:$0xf]
    %v457 = vld [vmem:[#allocation10 + $0x48] sm:$0xf]
    %v458 = vld [vmem:[#allocation10 + $0x4c] sm:$0xf]
    %v459 = vld [vmem:[#allocation10 + $0x50] sm:$0xf]
    %v460 = vld [vmem:[#allocation10 + $0x54] sm:$0xf]
    %v461 = vld [vmem:[#allocation10 + $0x58] sm:$0xf]
    %v462 = vld [vmem:[#allocation10 + $0x5c] sm:$0xf]
    %v463 = vld [vmem:[#allocation10 + $0x60] sm:$0xf]
    %v464 = vld [vmem:[#allocation10 + $0x64] sm:$0xf]
    %v465 = vld [vmem:[#allocation10 + $0x68] sm:$0xf]
    %v466 = vld [vmem:[#allocation10 + $0x6c] sm:$0xf]
    %v467 = vld [vmem:[#allocation10 + $0x70] sm:$0xf]
    %v468 = vld [vmem:[#allocation10 + $0x74] sm:$0xf]
    %v469 = vld [vmem:[#allocation10 + $0x78] sm:$0xf]
    %v470 = vld [vmem:[#allocation10 + $0x7c] sm:$0xf]
    %v471 = vld [vmem:[%s6] sm:$0x1]
    %v473 = vperm.slane %v471, 0
    %v507 = vunpack.c.l.b16 %v439
    %v508 = vunpack.c.l.b16 %v440
    %v509 = vunpack.c.l.b16 %v441
    %v510 = vunpack.c.l.b16 %v442
    %v511 = vunpack.c.l.b16 %v443
    %v512 = vunpack.c.l.b16 %v444
    %v513 = vunpack.c.l.b16 %v445
    %v514 = vunpack.c.l.b16 %v446
    %v515 = vunpack.c.l.b16 %v447
    %v516 = vunpack.c.l.b16 %v448
    %v517 = vunpack.c.l.b16 %v449
    %v518 = vunpack.c.l.b16 %v450
    %v519 = vunpack.c.l.b16 %v451
    %v520 = vunpack.c.l.b16 %v452
    %v521 = vunpack.c.l.b16 %v453
    %v522 = vunpack.c.l.b16 %v454
    %v523 = vunpack.c.l.b16 %v455
    %v524 = vunpack.c.l.b16 %v456
    %v525 = vunpack.c.l.b16 %v457
    %v526 = vunpack.c.l.b16 %v458
    %v527 = vunpack.c.l.b16 %v459
    %v528 = vunpack.c.l.b16 %v460
    %v529 = vunpack.c.l.b16 %v461
    %v530 = vunpack.c.l.b16 %v462
    %v531 = vunpack.c.l.b16 %v463
    %v532 = vunpack.c.l.b16 %v464
    %v533 = vunpack.c.l.b16 %v465
    %v534 = vunpack.c.l.b16 %v466
    %v535 = vunpack.c.l.b16 %v467
    %v536 = vunpack.c.l.b16 %v468
    %v537 = vunpack.c.l.b16 %v469
    %v538 = vunpack.c.l.b16 %v470
    %v539 = vpack.c.b16 %v508, %v507
    %v540 = vpack.c.b16 %v510, %v509
    %v541 = vpack.c.b16 %v512, %v511
    %v542 = vpack.c.b16 %v514, %v513
    %v543 = vpack.c.b16 %v516, %v515
    %v544 = vpack.c.b16 %v518, %v517
    %v545 = vpack.c.b16 %v520, %v519
    %v546 = vpack.c.b16 %v522, %v521
    %v547 = vpack.c.b16 %v524, %v523
    %v548 = vpack.c.b16 %v526, %v525
    %v549 = vpack.c.b16 %v528, %v527
    %v550 = vpack.c.b16 %v530, %v529
    %v551 = vpack.c.b16 %v532, %v531
    %v552 = vpack.c.b16 %v534, %v533
    %v553 = vpack.c.b16 %v536, %v535
    %v554 = vpack.c.b16 %v538, %v537
    %571 = vmatpush.bf16.msra.mxu0 %v546
    %572 = vmatpush.bf16.msra.mxu0 %v545
    %573 = vmatpush.bf16.msra.mxu0 %v544
    %574 = vmatpush.bf16.msra.mxu0 %v543
    %575 = vmatpush.bf16.msra.mxu0 %v542
    %576 = vmatpush.bf16.msra.mxu0 %v541
    %577 = vmatpush.bf16.msra.mxu0 %v540
    %578 = vmatpush.bf16.msra.mxu0 %v539
    %579 = vmatmul.bf16.gmra.mxu0 %v437
    %v580 = vpop.f32.mrf.mxu0
    %v581 = vadd.f32 %v473, %v580
    %v582 = vpop.f32.mrf.mxu0
    %v583 = vadd.f32 %v473, %v582
    %584 = vdwg.mxu0
    %585 = vmatpush.bf16.msra.mxu0 %v554
    %586 = vmatpush.bf16.msra.mxu0 %v553
    %587 = vmatpush.bf16.msra.mxu0 %v552
    %588 = vmatpush.bf16.msra.mxu0 %v551
    %589 = vmatpush.bf16.msra.mxu0 %v550
    %590 = vmatpush.bf16.msra.mxu0 %v549
    %591 = vmatpush.bf16.msra.mxu0 %v548
    %592 = vmatpush.bf16.msra.mxu0 %v547
    %593 = vmatmul.bf16.gmra.mxu0 %v438
    %v594 = vpop.f32.mrf.mxu0
    %v595 = vadd.f32 %v581, %v594
    %v596 = vpop.f32.mrf.mxu0
    %v597 = vadd.f32 %v583, %v596
    %598 = vdwg.mxu0
    %v599 = vtanh.pop %v595
    %v600 = vtanh.pop %v597
    %v601 = vmul.f32 %v599, 2.0
    %v602 = vmul.f32 %v600, 2.0
    %v603 = vpack.c.bf16 %v601, %v601
    %v604 = vpack.c.bf16 %v602, %v602
    %605 = vst [vmem:[#allocation11] sm:$0xf] %v603
    %606 = vst [vmem:[#allocation11 + $0x4] sm:$0xf] %v604
    // Predicated region
    $region50: #{tpu_custom_call.1} parent=1 // pred_check
      _
    $region51: #{tpu_custom_call.1} parent=1 // pred_check_branch
      %608 = sbr.rel (0) target = $region53
    $region52: #{tpu_custom_call.1} parent=1 // pred_region
      %610 = vsyncadd [#allocation4], 0
      %s611 = sshll.u32 [#allocation11], 4
      %s612 = int_to_ptr.vmem [resolvable:$true] %s611
      %s613 = sshll.u32 %s7, 4
      %s614 = int_to_ptr.hbm [resolvable:$true] %s613
      %619 = dma.vmem_to_hbm [thread:$0]  %s612, 128, %s614, [#allocation4], 64, 64, 4
    $region53: #{tpu_custom_call.1} parent=1 // pred_fallthru
      _
    // Predicated region
    $region54: #{tpu_custom_call.1} parent=1 // pred_check
      _
    $region55: #{tpu_custom_call.1} parent=1 // pred_check_branch
      %621 = sbr.rel (0) target = $region57
    $region56: #{tpu_custom_call.1} parent=1 // pred_region
      %623 = dma.done [#allocation4], 128
    $region57: #{tpu_custom_call.1} parent=1 // pred_fallthru
      _
    %624 = vsyncpa [#allocation3], 1
    %625 = vsyncpa [#allocation6], 1
    %626 = vsyncpa [#allocation9], 1
    %627 = vsyncpa [#allocation4], 1

</llo_original>
